<compile_context>
chip_gen: v5e
topology: v5e:2x2
jax: 0.10.0
libtpu: 0.0.40
codegen_flags: <defaults>
</compile_context>

<pallas_src>
import functools
import math

import jax
import jax.numpy as jnp
from jax.experimental import pallas as pl
from jax.experimental.pallas import tpu as pltpu


def _round_up(v, m):
    return ((v + m - 1) // m) * m


def _bf16_activations_supported():
    """bf16 EUP/VPU exists on v6e/v7x; keep f32 activations on v2-v5."""
    try:
        kind = jax.devices()[0].device_kind.lower()
    except Exception:
        return True
    return not any(v in kind for v in ("v2", "v3", "v4", "v5"))


def _irt_kernel(c_ref, x_ref,
                w0_ref, b0_ref, w1_ref, b1_ref,
                w2_ref, b2_ref, w3_ref, b3_ref,
                out_ref, *, bf16_act):
    """One batch tile: 4-layer MLP (tanh, tanh, relu, linear) + IRT combine.

    MXU matmuls use bf16 operands with f32 accumulation.  The last layer
    (32 -> 1) runs on the VPU+XLU (mul + lane reduce) instead of wasting an
    MXU pass on an N=1 matmul.  c = a + icl*gamma is precombined in the
    wrapper, so the kernel epilogue is just (c - d) and a single packed store.
    """
    x = x_ref[...]                                               # [TB, F] bf16

    h = jnp.dot(x, w0_ref[...], preferred_element_type=jnp.float32) + b0_ref[...]
    h = (jnp.tanh(h.astype(jnp.bfloat16)) if bf16_act
         else jnp.tanh(h).astype(jnp.bfloat16))                  # [TB, 128] bf16
    h = jnp.dot(h, w1_ref[...], preferred_element_type=jnp.float32) + b1_ref[...]
    h = (jnp.tanh(h.astype(jnp.bfloat16)) if bf16_act
         else jnp.tanh(h).astype(jnp.bfloat16))                  # [TB, 64] bf16
    h = jnp.dot(h, w2_ref[...], preferred_element_type=jnp.float32) + b2_ref[...]
    h = jnp.maximum(h, 0.0)                                      # [TB, 32] f32

    # fc3: VPU multiply + XLU lane reduce -> [TB, 1] f32.
    d = jnp.sum(h * w3_ref[...], axis=-1, keepdims=True) + b3_ref[...]

    logits = c_ref[...] - d                                      # c = a + icl*gamma

    # Single packed store -> one writeback DMA per tile, one vst per block.
    out_ref[...] = jnp.concatenate([logits, d], axis=-1)


def latent_factor_irt_forward(tester_id, item_ftr, icl_flag, params,
                              enable_gamma=True, block_rows=4096):
    """
    tester_id: int32 [B]
    item_ftr:  float32 [B, num_item_ftr]
    icl_flag:  float32/int [B]   (0/1 per example)
    returns (logits [B,1], d [B,1]) -- matches the PyTorch module semantics.
    """
    B, F = item_ftr.shape

    # Embedding lookups + the a + icl*gamma combine stay in JAX glue (tiny
    # gathers; the combine fuses into the gather op).
    a = params["testers_w"][tester_id]                           # [B, 1]
    if enable_gamma:
        gamma = params["gamma_w"][tester_id]                     # [B, 1]
        icl = jnp.asarray(icl_flag, jnp.float32).reshape(B, 1)
        c = a + icl * gamma
    else:
        c = a

    # Batch tiling: big tiles (per-row work is tiny, so per-step overhead is
    # the binding cost), >= 2 tiles when B > 16 so v7x megacore has work on
    # both TensorCores, rounded to 16 rows (bf16 packed sublane tile).
    if B > 16:
        grid_b = max(2, pl.cdiv(B, block_rows))
        tb = _round_up(pl.cdiv(B, grid_b), 16)
    else:
        tb = _round_up(max(B, 1), 16)
    grid_b = pl.cdiv(B, tb)
    Bp = grid_b * tb
    pad = Bp - B

    x = item_ftr.astype(jnp.bfloat16)                            # halve HBM traffic
    if pad:
        x = jnp.pad(x, ((0, pad), (0, 0)))
        c = jnp.pad(c, ((0, pad), (0, 0)))

    # Weights: bf16 for MXU operands, biases stay f32.  Constant index maps
    # keep them VMEM-resident across all grid steps.
    w0 = params["w0"].astype(jnp.bfloat16); b0 = params["b0"]    # [F,128],[1,128]
    w1 = params["w1"].astype(jnp.bfloat16); b1 = params["b1"]    # [128,64],[1,64]
    w2 = params["w2"].astype(jnp.bfloat16); b2 = params["b2"]    # [64,32], [1,32]
    w3_row = params["w3"].T                                      # [1,32]  f32
    b3 = params["b3"]                                            # [1,1]   f32

    bf16_act = _bf16_activations_supported()

    def batch_spec(cols):
        return pl.BlockSpec((tb, cols), lambda i: (i, 0))

    def resident_spec(shape):
        return pl.BlockSpec(shape, lambda i: (0, 0))

    in_specs = [
        batch_spec(1), batch_spec(F),
        resident_spec(w0.shape), resident_spec(b0.shape),
        resident_spec(w1.shape), resident_spec(b1.shape),
        resident_spec(w2.shape), resident_spec(b2.shape),
        resident_spec(w3_row.shape), resident_spec(b3.shape),
    ]

    flops = 2 * Bp * (F * 128 + 128 * 64 + 64 * 32 + 32) + Bp
    transcendentals = Bp * (128 + 64)
    bytes_accessed = (Bp * F * 2 + Bp * 4 + Bp * 2 * 4
                      + (F * 128 + 128 * 64 + 64 * 32) * 2
                      + (128 + 64 + 32 + 32 + 1) * 4)

    packed = pl.pallas_call(
        functools.partial(_irt_kernel, bf16_act=bf16_act),
        out_shape=jax.ShapeDtypeStruct((Bp, 2), jnp.float32),
        grid=(grid_b,),
        in_specs=in_specs,
        out_specs=batch_spec(2),
        compiler_params=pltpu.CompilerParams(
            dimension_semantics=("parallel",),       # megacore sharding on v7x
            vmem_limit_bytes=32 * 1024 * 1024),      # v5e scoped default is 16 MiB
        cost_estimate=pl.CostEstimate(
            flops=int(flops),
            transcendentals=int(transcendentals),
            bytes_accessed=int(bytes_accessed)),
    )(c, x, w0, b0, w1, b1, w2, b2, w3_row, b3)

    logits = packed[:B, 0:1]
    d = packed[:B, 1:2]
    return logits, d


def init_params(key, num_testers, num_item_ftr):
    """Deterministic init mirroring the PyTorch module's parameter shapes."""
    ks = jax.random.split(key, 10)

    def linear(kw, kb, fan_in, fan_out):
        bound = 1.0 / math.sqrt(fan_in)
        w = jax.random.uniform(kw, (fan_in, fan_out), jnp.float32, -bound, bound)
        b = jax.random.uniform(kb, (1, fan_out), jnp.float32, -bound, bound)
        return w, b

    params = {}
    params["testers_w"] = jax.random.normal(ks[0], (num_testers, 1), jnp.float32)
    params["gamma_w"] = jax.random.normal(ks[1], (num_testers, 1), jnp.float32)
    params["w0"], params["b0"] = linear(ks[2], ks[3], num_item_ftr, 128)
    params["w1"], params["b1"] = linear(ks[4], ks[5], 128, 64)
    params["w2"], params["b2"] = linear(ks[6], ks[7], 64, 32)
    params["w3"], params["b3"] = linear(ks[8], ks[9], 32, 1)
    return params


def reference_forward_f32(tester_id, item_ftr, icl_flag, params, enable_gamma=True):
    """Pure-f32 JAX reference (original module semantics)."""
    a = params["testers_w"][tester_id]
    gamma = params["gamma_w"][tester_id]
    d = jnp.tanh(item_ftr @ params["w0"] + params["b0"])
    d = jnp.tanh(d @ params["w1"] + params["b1"])
    d = jax.nn.relu(d @ params["w2"] + params["b2"])
    d = d @ params["w3"] + params["b3"]
    icl = jnp.asarray(icl_flag, jnp.float32).reshape(-1, 1)
    if enable_gamma:
        return a + icl * gamma - d, d
    return a - d, d


def reference_forward_bf16(tester_id, item_ftr, icl_flag, params,
                           enable_gamma=True, bf16_act=True):
    """Pure-JAX reference with the same bf16-matmul / activation path as the kernel."""
    a = params["testers_w"][tester_id]
    gamma = params["gamma_w"][tester_id]
    x = item_ftr.astype(jnp.bfloat16)

    def act(h):
        return (jnp.tanh(h.astype(jnp.bfloat16)) if bf16_act
                else jnp.tanh(h).astype(jnp.bfloat16))

    h = jnp.dot(x, params["w0"].astype(jnp.bfloat16),
                preferred_element_type=jnp.float32) + params["b0"]
    h = act(h)
    h = jnp.dot(h, params["w1"].astype(jnp.bfloat16),
                preferred_element_type=jnp.float32) + params["b1"]
    h = act(h)
    h = jnp.maximum(jnp.dot(h, params["w2"].astype(jnp.bfloat16),
                            preferred_element_type=jnp.float32) + params["b2"], 0.0)
    d = jnp.sum(h * params["w3"].T, axis=-1, keepdims=True) + params["b3"]
    icl = jnp.asarray(icl_flag, jnp.float32).reshape(-1, 1)
    if enable_gamma:
        return a + icl * gamma - d, d
    return a - d, d


def _check_case(key, params, num_testers, num_item_ftr, batch, enable_gamma,
                bf16_act):
    k_tid, k_ftr, k_icl = jax.random.split(key, 3)
    tester_id = jax.random.randint(k_tid, (batch,), 0, num_testers, jnp.int32)
    item_ftr = jax.random.normal(k_ftr, (batch, num_item_ftr), jnp.float32)
    icl_flag = jax.random.bernoulli(k_icl, 0.5, (batch,)).astype(jnp.float32)

    logits, d = latent_factor_irt_forward(tester_id, item_ftr, icl_flag,
                                          params, enable_gamma)
    jax.block_until_ready((logits, d))

    # Same-math reference (bf16 MXU operands / same activation path): tight-ish.
    ref_logits, ref_d = reference_forward_bf16(tester_id, item_ftr, icl_flag,
                                               params, enable_gamma, bf16_act)
    assert jnp.allclose(logits, ref_logits, atol=1e-2, rtol=1e-2)
    assert jnp.allclose(d, ref_d, atol=1e-2, rtol=1e-2)

    # Original f32 module semantics: loose check (bf16 MXU operands).
    f32_logits, f32_d = reference_forward_f32(tester_id, item_ftr, icl_flag,
                                              params, enable_gamma)
    assert jnp.allclose(logits, f32_logits, atol=1e-1)
    assert jnp.allclose(d, f32_d, atol=1e-1)


if __name__ == "__main__":
    key = jax.random.PRNGKey(0)
    k_params, k_small, k_multi = jax.random.split(key, 3)

    num_testers = 10
    num_item_ftr = 16
    enable_gamma = True

    params = init_params(k_params, num_testers, num_item_ftr)
    bf16_act = _bf16_activations_supported()

    # Small batch (single-tile path).
    _check_case(k_small, params, num_testers, num_item_ftr,
                batch=8, enable_gamma=enable_gamma, bf16_act=bf16_act)

    # Moderate batch exercising the forced >=2-tile (megacore) path.
    _check_case(k_multi, params, num_testers, num_item_ftr,
                batch=200, enable_gamma=enable_gamma, bf16_act=bf16_act)

    print("KERNEL_OK")
</pallas_src>

<mosaic_0001>
module attributes {stable_mosaic.version = 11 : i64} {
  func.func @_irt_kernel(%arg0: i32, %arg1: memref<16x1xf32, #tpu.memory_space<vmem>>, %arg2: memref<16x16xbf16, #tpu.memory_space<vmem>>, %arg3: memref<16x128xbf16, #tpu.memory_space<vmem>>, %arg4: memref<1x128xf32, #tpu.memory_space<vmem>>, %arg5: memref<128x64xbf16, #tpu.memory_space<vmem>>, %arg6: memref<1x64xf32, #tpu.memory_space<vmem>>, %arg7: memref<64x32xbf16, #tpu.memory_space<vmem>>, %arg8: memref<1x32xf32, #tpu.memory_space<vmem>>, %arg9: memref<1x32xf32, #tpu.memory_space<vmem>>, %arg10: memref<1x1xf32, #tpu.memory_space<vmem>>, %arg11: memref<16x2xf32, #tpu.memory_space<vmem>>) attributes {dimension_semantics = [#tpu.dimension_semantics<parallel>], iteration_bounds = array<i64: 1>, scalar_prefetch = 0 : i64, scratch_operands = 0 : i64, tpu.core_type = #tpu.core_type<tc>, window_params = [{transform_indices = @transform_0, window_bounds = array<i64: 16, 1>}, {transform_indices = @transform_1, window_bounds = array<i64: 16, 16>}, {pipeline_mode = #tpu.pipeline_mode<synchronous>, transform_indices = @transform_2, window_bounds = array<i64: 16, 128>}, {pipeline_mode = #tpu.pipeline_mode<synchronous>, transform_indices = @transform_3, window_bounds = array<i64: 1, 128>}, {pipeline_mode = #tpu.pipeline_mode<synchronous>, transform_indices = @transform_4, window_bounds = array<i64: 128, 64>}, {pipeline_mode = #tpu.pipeline_mode<synchronous>, transform_indices = @transform_5, window_bounds = array<i64: 1, 64>}, {pipeline_mode = #tpu.pipeline_mode<synchronous>, transform_indices = @transform_6, window_bounds = array<i64: 64, 32>}, {pipeline_mode = #tpu.pipeline_mode<synchronous>, transform_indices = @transform_7, window_bounds = array<i64: 1, 32>}, {pipeline_mode = #tpu.pipeline_mode<synchronous>, transform_indices = @transform_8, window_bounds = array<i64: 1, 32>}, {pipeline_mode = #tpu.pipeline_mode<synchronous>, transform_indices = @transform_9, window_bounds = array<i64: 1, 1>}, {transform_indices = @transform_10, window_bounds = array<i64: 16, 2>}]} {
    %c0 = arith.constant 0 : index
    %c0_0 = arith.constant 0 : index
    %0 = vector.load %arg2[%c0, %c0_0] : memref<16x16xbf16, #tpu.memory_space<vmem>>, vector<16x16xbf16>
    %c0_1 = arith.constant 0 : index
    %c0_2 = arith.constant 0 : index
    %1 = vector.load %arg3[%c0_1, %c0_2] : memref<16x128xbf16, #tpu.memory_space<vmem>>, vector<16x128xbf16>
    %cst = arith.constant dense<0.000000e+00> : vector<16x128xf32>
    %2 = tpu.matmul %0, %1, %cst {dimension_numbers = #tpu.dot_dimension_numbers<[1], [0], [0], [1], [0, 0, 1, 1], [], []>} : vector<16x16xbf16>, vector<16x128xbf16>, vector<16x128xf32> -> vector<16x128xf32>
    %c0_3 = arith.constant 0 : index
    %c0_4 = arith.constant 0 : index
    %3 = vector.load %arg4[%c0_3, %c0_4] : memref<1x128xf32, #tpu.memory_space<vmem>>, vector<1x128xf32>
    %4 = vector.broadcast %3 : vector<1x128xf32> to vector<16x128xf32>
    %5 = arith.addf %2, %4 : vector<16x128xf32>
    %6 = arith.truncf %5 : vector<16x128xf32> to vector<16x128xbf16>
    %7 = math.tanh %6 : vector<16x128xbf16>
    %c0_5 = arith.constant 0 : index
    %c0_6 = arith.constant 0 : index
    %8 = vector.load %arg5[%c0_5, %c0_6] : memref<128x64xbf16, #tpu.memory_space<vmem>>, vector<128x64xbf16>
    %cst_7 = arith.constant dense<0.000000e+00> : vector<16x64xf32>
    %9 = tpu.matmul %7, %8, %cst_7 {dimension_numbers = #tpu.dot_dimension_numbers<[1], [0], [0], [1], [0, 0, 1, 1], [], []>} : vector<16x128xbf16>, vector<128x64xbf16>, vector<16x64xf32> -> vector<16x64xf32>
    %c0_8 = arith.constant 0 : index
    %c0_9 = arith.constant 0 : index
    %10 = vector.load %arg6[%c0_8, %c0_9] : memref<1x64xf32, #tpu.memory_space<vmem>>, vector<1x64xf32>
    %11 = vector.broadcast %10 : vector<1x64xf32> to vector<16x64xf32>
    %12 = arith.addf %9, %11 : vector<16x64xf32>
    %13 = arith.truncf %12 : vector<16x64xf32> to vector<16x64xbf16>
    %14 = math.tanh %13 : vector<16x64xbf16>
    %c0_10 = arith.constant 0 : index
    %c0_11 = arith.constant 0 : index
    %15 = vector.load %arg7[%c0_10, %c0_11] : memref<64x32xbf16, #tpu.memory_space<vmem>>, vector<64x32xbf16>
    %cst_12 = arith.constant dense<0.000000e+00> : vector<16x32xf32>
    %16 = tpu.matmul %14, %15, %cst_12 {dimension_numbers = #tpu.dot_dimension_numbers<[1], [0], [0], [1], [0, 0, 1, 1], [], []>} : vector<16x64xbf16>, vector<64x32xbf16>, vector<16x32xf32> -> vector<16x32xf32>
    %c0_13 = arith.constant 0 : index
    %c0_14 = arith.constant 0 : index
    %17 = vector.load %arg8[%c0_13, %c0_14] : memref<1x32xf32, #tpu.memory_space<vmem>>, vector<1x32xf32>
    %18 = vector.broadcast %17 : vector<1x32xf32> to vector<16x32xf32>
    %19 = arith.addf %16, %18 : vector<16x32xf32>
    %cst_15 = arith.constant 0.000000e+00 : f32
    %20 = vector.broadcast %cst_15 : f32 to vector<16x32xf32>
    %21 = arith.maximumf %19, %20 : vector<16x32xf32>
    %c0_16 = arith.constant 0 : index
    %c0_17 = arith.constant 0 : index
    %22 = vector.load %arg9[%c0_16, %c0_17] : memref<1x32xf32, #tpu.memory_space<vmem>>, vector<1x32xf32>
    %23 = vector.broadcast %22 : vector<1x32xf32> to vector<16x32xf32>
    %24 = arith.mulf %21, %23 : vector<16x32xf32>
    %cst_18 = arith.constant dense<0.000000e+00> : vector<16xf32>
    %25 = vector.multi_reduction <add>, %24, %cst_18 [1] : vector<16x32xf32> to vector<16xf32>
    %26 = vector.shape_cast %25 : vector<16xf32> to vector<16x1xf32>
    %c0_19 = arith.constant 0 : index
    %c0_20 = arith.constant 0 : index
    %27 = vector.load %arg10[%c0_19, %c0_20] : memref<1x1xf32, #tpu.memory_space<vmem>>, vector<1x1xf32>
    %28 = vector.broadcast %27 : vector<1x1xf32> to vector<16x1xf32>
    %29 = arith.addf %26, %28 : vector<16x1xf32>
    %c0_21 = arith.constant 0 : index
    %c0_22 = arith.constant 0 : index
    %30 = vector.load %arg1[%c0_21, %c0_22] : memref<16x1xf32, #tpu.memory_space<vmem>>, vector<16x1xf32>
    %31 = arith.subf %30, %29 : vector<16x1xf32>
    %32 = tpu.concatenate %31, %29 in 1 : vector<16x1xf32>, vector<16x1xf32> -> vector<16x2xf32>
    %c0_23 = arith.constant 0 : index
    %c0_24 = arith.constant 0 : index
    %33 = vector.load %arg11[%c0_23, %c0_24] : memref<16x2xf32, #tpu.memory_space<vmem>>, vector<16x2xf32>
    tpu.vector_store %arg11[%c0_23, %c0_24], %32 {strides = array<i32>} : memref<16x2xf32, #tpu.memory_space<vmem>>, vector<16x2xf32>,
    return
  }
  func.func @transform_0(%arg0: i32) -> (i32, i32) {
    %c0_i32 = arith.constant 0 : i32
    %c0_i32_0 = arith.constant 0 : i32
    return %arg0, %c0_i32 : i32, i32
  }
  func.func @transform_1(%arg0: i32) -> (i32, i32) {
    %c0_i32 = arith.constant 0 : i32
    %c0_i32_0 = arith.constant 0 : i32
    return %arg0, %c0_i32 : i32, i32
  }
  func.func @transform_2(%arg0: i32) -> (i32, i32) {
    %c0_i32 = arith.constant 0 : i32
    %c0_i32_0 = arith.constant 0 : i32
    %c0_i32_1 = arith.constant 0 : i32
    return %c0_i32, %c0_i32_0 : i32, i32
  }
  func.func @transform_3(%arg0: i32) -> (i32, i32) {
    %c0_i32 = arith.constant 0 : i32
    %c0_i32_0 = arith.constant 0 : i32
    %c0_i32_1 = arith.constant 0 : i32
    return %c0_i32, %c0_i32_0 : i32, i32
  }
  func.func @transform_4(%arg0: i32) -> (i32, i32) {
    %c0_i32 = arith.constant 0 : i32
    %c0_i32_0 = arith.constant 0 : i32
    %c0_i32_1 = arith.constant 0 : i32
    return %c0_i32, %c0_i32_0 : i32, i32
  }
  func.func @transform_5(%arg0: i32) -> (i32, i32) {
    %c0_i32 = arith.constant 0 : i32
    %c0_i32_0 = arith.constant 0 : i32
    %c0_i32_1 = arith.constant 0 : i32
    return %c0_i32, %c0_i32_0 : i32, i32
  }
  func.func @transform_6(%arg0: i32) -> (i32, i32) {
    %c0_i32 = arith.constant 0 : i32
    %c0_i32_0 = arith.constant 0 : i32
    %c0_i32_1 = arith.constant 0 : i32
    return %c0_i32, %c0_i32_0 : i32, i32
  }
  func.func @transform_7(%arg0: i32) -> (i32, i32) {
    %c0_i32 = arith.constant 0 : i32
    %c0_i32_0 = arith.constant 0 : i32
    %c0_i32_1 = arith.constant 0 : i32
    return %c0_i32, %c0_i32_0 : i32, i32
  }
  func.func @transform_8(%arg0: i32) -> (i32, i32) {
    %c0_i32 = arith.constant 0 : i32
    %c0_i32_0 = arith.constant 0 : i32
    %c0_i32_1 = arith.constant 0 : i32
    return %c0_i32, %c0_i32_0 : i32, i32
  }
  func.func @transform_9(%arg0: i32) -> (i32, i32) {
    %c0_i32 = arith.constant 0 : i32
    %c0_i32_0 = arith.constant 0 : i32
    %c0_i32_1 = arith.constant 0 : i32
    return %c0_i32, %c0_i32_0 : i32, i32
  }
  func.func @transform_10(%arg0: i32) -> (i32, i32) {
    %c0_i32 = arith.constant 0 : i32
    %c0_i32_0 = arith.constant 0 : i32
    return %arg0, %c0_i32 : i32, i32
  }
}

</mosaic_0001>

<llo_original>
// kernel: tpu_custom_call.1
$region0: #{tpu_custom_call.1}
  #allocation0 [shape = 'u32[]', space=smem, size = 0x4, offset = 0x4, fixed_abs, tag = 'smem constant byte address 0x4 - core index']
  #allocation1 [shape = 'u32[72,128]{1,0:T(1,128)}', space=vmem, size = 0x9000, scoped, tag = 'internal scratch']
  #allocation2 [shape = 'f32[1,1]{1,0:T(1,128)S(1)}', space=vmem, size = 0x200, scoped, tag = 'scoped memory for tpu_custom_call.1']
  %s0 = inlined_call_operand.vmem [shape: f32[16,1], index: 0, kind: input, shape index: {}]
  %s1 = inlined_call_operand.vmem [shape: bf16[16,16], index: 1, kind: input, shape index: {}]
  %s2 = inlined_call_operand.vmem [shape: bf16[16,128], index: 2, kind: input, shape index: {}]
  %s3 = inlined_call_operand.vmem [shape: f32[1,128], index: 3, kind: input, shape index: {}]
  %s4 = inlined_call_operand.vmem [shape: bf16[128,64], index: 4, kind: input, shape index: {}]
  %s5 = inlined_call_operand.vmem [shape: f32[1,64], index: 5, kind: input, shape index: {}]
  %s6 = inlined_call_operand.vmem [shape: bf16[64,32], index: 6, kind: input, shape index: {}]
  %s7 = inlined_call_operand.vmem [shape: f32[1,32], index: 7, kind: input, shape index: {}]
  %s8 = inlined_call_operand.vmem [shape: f32[1,32], index: 8, kind: input, shape index: {}]
  %s9 = inlined_call_operand.<no memory space> [shape: f32[1,1], index: 9, kind: input, shape index: {}]
  %s10 = inlined_call_operand.vmem [shape: f32[16,2], index: 10, kind: output, shape index: {}]
  %s11 = sld [smem:[#allocation0]]
  $region50: #{tpu_custom_call.1} parent=0
    _
  %s13 = ssub.s32 1, %s11
  %s14 = scalar_select 0, %s13, %s11
  %v15 = vstv %s9
  %16 = vst [vmem:[#allocation2] sm:$0x1] %v15
  // Predicated region
  $region2: #{tpu_custom_call.1} parent=0 // pred_check
    _
  $region3: #{tpu_custom_call.1} parent=0 // pred_check_branch
    %18 = sbr.rel (0) target = $region5
  $region4: #{tpu_custom_call.1} parent=0 // pred_region
    _
  $region5: #{tpu_custom_call.1} parent=0 // pred_fallthru
    _
  // Predicated region
  $region6: #{tpu_custom_call.1} parent=0 // pred_check
    _
  $region7: #{tpu_custom_call.1} parent=0 // pred_check_branch
    %20 = sbr.rel (0) target = $region9
  $region8: #{tpu_custom_call.1} parent=0 // pred_region
    _
  $region9: #{tpu_custom_call.1} parent=0 // pred_fallthru
    _
  // Predicated region
  $region10: #{tpu_custom_call.1} parent=0 // pred_check
    _
  $region11: #{tpu_custom_call.1} parent=0 // pred_check_branch
    %22 = sbr.rel (0) target = $region13
  $region12: #{tpu_custom_call.1} parent=0 // pred_region
    _
  $region13: #{tpu_custom_call.1} parent=0 // pred_fallthru
    _
  // Predicated region
  $region14: #{tpu_custom_call.1} parent=0 // pred_check
    _
  $region15: #{tpu_custom_call.1} parent=0 // pred_check_branch
    %24 = sbr.rel (0) target = $region17
  $region16: #{tpu_custom_call.1} parent=0 // pred_region
    _
  $region17: #{tpu_custom_call.1} parent=0 // pred_fallthru
    _
  // Predicated region
  $region18: #{tpu_custom_call.1} parent=0 // pred_check
    _
  $region19: #{tpu_custom_call.1} parent=0 // pred_check_branch
    %26 = sbr.rel (0) target = $region21
  $region20: #{tpu_custom_call.1} parent=0 // pred_region
    _
  $region21: #{tpu_custom_call.1} parent=0 // pred_fallthru
    _
  // Predicated region
  $region22: #{tpu_custom_call.1} parent=0 // pred_check
    _
  $region23: #{tpu_custom_call.1} parent=0 // pred_check_branch
    %28 = sbr.rel (0) target = $region25
  $region24: #{tpu_custom_call.1} parent=0 // pred_region
    _
  $region25: #{tpu_custom_call.1} parent=0 // pred_fallthru
    _
  // Predicated region
  $region26: #{tpu_custom_call.1} parent=0 // pred_check
    _
  $region27: #{tpu_custom_call.1} parent=0 // pred_check_branch
    %30 = sbr.rel (0) target = $region29
  $region28: #{tpu_custom_call.1} parent=0 // pred_region
    _
  $region29: #{tpu_custom_call.1} parent=0 // pred_fallthru
    _
  // Predicated region
  $region30: #{tpu_custom_call.1} parent=0 // pred_check
    _
  $region31: #{tpu_custom_call.1} parent=0 // pred_check_branch
    %32 = sbr.rel (0) target = $region33
  $region32: #{tpu_custom_call.1} parent=0 // pred_region
    _
  $region33: #{tpu_custom_call.1} parent=0 // pred_fallthru
    _
  // Predicated region
  $region34: #{tpu_custom_call.1} parent=0 // pred_check
    _
  $region35: #{tpu_custom_call.1} parent=0 // pred_check_branch
    %34 = sbr.rel (0) target = $region37
  $region36: #{tpu_custom_call.1} parent=0 // pred_region
    _
  $region37: #{tpu_custom_call.1} parent=0 // pred_fallthru
    _
  // Predicated region
  $region38: #{tpu_custom_call.1} parent=0 // pred_check
    _
  $region39: #{tpu_custom_call.1} parent=0 // pred_check_branch
    %36 = sbr.rel (0) target = $region41
  $region40: #{tpu_custom_call.1} parent=0 // pred_region
    _
  $region41: #{tpu_custom_call.1} parent=0 // pred_fallthru
    _
  %v38 = vld [vmem:[%s1] sm:$0xf]
  %v39 = vld [vmem:[%s1 + $0x4] sm:$0xf]
  %v40 = vld [vmem:[%s2] sm:$0xf]
  %v41 = vld [vmem:[%s2 + $0x4] sm:$0xf]
  %v42 = vld [vmem:[%s3] sm:$0x1]
  %v44 = vperm.slane %v42, 0
  %v48 = vunpack.c.l.b16 %v38
  %v49 = vunpack.c.l.b16 %v39
  %v50 = vpack.c.b16 %v49, %v48
  %v53 = vunpack.c.l.b16 %v40
  %v54 = vunpack.c.l.b16 %v41
  %v55 = vpack.c.b16 %v54, %v53
  %vm57 = vcmask 130048
  %v59 = vsel %vm57, %v50, 0
  %61 = vmatpush.bf16.msra.mxu0 0
  %62 = vmatpush.bf16.msra.mxu0 0
  %63 = vmatpush.bf16.msra.mxu0 0
  %64 = vmatpush.bf16.msra.mxu0 0
  %65 = vmatpush.bf16.msra.mxu0 0
  %66 = vmatpush.bf16.msra.mxu0 0
  %67 = vmatpush.bf16.msra.mxu0 0
  %68 = vmatpush.bf16.msra.mxu0 %v55
  %69 = vmatmul.bf16.gmra.mxu0 %v59
  %v70 = vpop.f32.mrf.mxu0
  %v71 = vadd.f32 %v44, %v70
  %v72 = vpop.f32.mrf.mxu0
  %v73 = vadd.f32 %v44, %v72
  %74 = vdwg.mxu0
  %v75 = vpack.c.bf16 %v73, %v71
  %v76 = vunpack.c.l.bf16 %v75
  %v77 = vunpack.c.h.bf16 %v75
  %v78 = vtanh.pop %v76
  %v79 = vtanh.pop %v77
  %v80 = vpack.c.bf16 %v79, %v78
  %v81 = vld [vmem:[%s4] sm:$0xf]
  %v82 = vld [vmem:[%s4 + $0x4] sm:$0xf]
  %v83 = vld [vmem:[%s4 + $0x8] sm:$0xf]
  %v84 = vld [vmem:[%s4 + $0xc] sm:$0xf]
  %v85 = vld [vmem:[%s4 + $0x10] sm:$0xf]
  %v86 = vld [vmem:[%s4 + $0x14] sm:$0xf]
  %v87 = vld [vmem:[%s4 + $0x18] sm:$0xf]
  %v88 = vld [vmem:[%s4 + $0x1c] sm:$0xf]
  %v89 = vld [vmem:[%s4 + $0x20] sm:$0xf]
  %v90 = vld [vmem:[%s4 + $0x24] sm:$0xf]
  %v91 = vld [vmem:[%s4 + $0x28] sm:$0xf]
  %v92 = vld [vmem:[%s4 + $0x2c] sm:$0xf]
  %v93 = vld [vmem:[%s4 + $0x30] sm:$0xf]
  %v94 = vld [vmem:[%s4 + $0x34] sm:$0xf]
  %v95 = vld [vmem:[%s4 + $0x38] sm:$0xf]
  %v96 = vld [vmem:[%s4 + $0x3c] sm:$0xf]
  %v97 = vld [vmem:[%s5] sm:$0x1]
  %v99 = vperm.slane %v97, 0
  %v117 = vunpack.c.l.b16 %v81
  %v118 = vunpack.c.l.b16 %v82
  %v119 = vunpack.c.l.b16 %v83
  %v120 = vunpack.c.l.b16 %v84
  %v121 = vunpack.c.l.b16 %v85
  %v122 = vunpack.c.l.b16 %v86
  %v123 = vunpack.c.l.b16 %v87
  %v124 = vunpack.c.l.b16 %v88
  %v125 = vunpack.c.l.b16 %v89
  %v126 = vunpack.c.l.b16 %v90
  %v127 = vunpack.c.l.b16 %v91
  %v128 = vunpack.c.l.b16 %v92
  %v129 = vunpack.c.l.b16 %v93
  %v130 = vunpack.c.l.b16 %v94
  %v131 = vunpack.c.l.b16 %v95
  %v132 = vunpack.c.l.b16 %v96
  %v133 = vpack.c.b16 %v118, %v117
  %v134 = vpack.c.b16 %v120, %v119
  %v135 = vpack.c.b16 %v122, %v121
  %v136 = vpack.c.b16 %v124, %v123
  %v137 = vpack.c.b16 %v126, %v125
  %v138 = vpack.c.b16 %v128, %v127
  %v139 = vpack.c.b16 %v130, %v129
  %v140 = vpack.c.b16 %v132, %v131
  %149 = vmatpush.bf16.msra.mxu0 %v140
  %150 = vmatpush.bf16.msra.mxu0 %v139
  %151 = vmatpush.bf16.msra.mxu0 %v138
  %152 = vmatpush.bf16.msra.mxu0 %v137
  %153 = vmatpush.bf16.msra.mxu0 %v136
  %154 = vmatpush.bf16.msra.mxu0 %v135
  %155 = vmatpush.bf16.msra.mxu0 %v134
  %156 = vmatpush.bf16.msra.mxu0 %v133
  %157 = vmatmul.bf16.gmra.mxu0 %v80
  %v158 = vpop.f32.mrf.mxu0
  %v159 = vadd.f32 %v99, %v158
  %v160 = vpop.f32.mrf.mxu0
  %v161 = vadd.f32 %v99, %v160
  %162 = vdwg.mxu0
  %v163 = vpack.c.bf16 %v161, %v159
  %v164 = vunpack.c.l.bf16 %v163
  %v165 = vunpack.c.h.bf16 %v163
  %v166 = vtanh.pop %v164
  %v167 = vtanh.pop %v165
  %v168 = vpack.c.bf16 %v167, %v166
  %v169 = vld [vmem:[%s6] sm:$0xf]
  %v170 = vld [vmem:[%s6 + $0x4] sm:$0xf]
  %v171 = vld [vmem:[%s6 + $0x8] sm:$0xf]
  %v172 = vld [vmem:[%s6 + $0xc] sm:$0xf]
  %v173 = vld [vmem:[%s6 + $0x10] sm:$0xf]
  %v174 = vld [vmem:[%s6 + $0x14] sm:$0xf]
  %v175 = vld [vmem:[%s6 + $0x18] sm:$0xf]
  %v176 = vld [vmem:[%s6 + $0x1c] sm:$0xf]
  %v177 = vld [vmem:[%s7] sm:$0x1]
  %v179 = vperm.slane %v177, 0
  %v189 = vunpack.c.l.b16 %v169
  %v190 = vunpack.c.l.b16 %v170
  %v191 = vunpack.c.l.b16 %v171
  %v192 = vunpack.c.l.b16 %v172
  %v193 = vunpack.c.l.b16 %v173
  %v194 = vunpack.c.l.b16 %v174
  %v195 = vunpack.c.l.b16 %v175
  %v196 = vunpack.c.l.b16 %v176
  %v197 = vpack.c.b16 %v190, %v189
  %v198 = vpack.c.b16 %v192, %v191
  %v199 = vpack.c.b16 %v194, %v193
  %v200 = vpack.c.b16 %v196, %v195
  %vm205 = vcmask 523264
  %v207 = vsel %vm205, %v168, 0
  %209 = vmatpush.bf16.msra.mxu0 0
  %210 = vmatpush.bf16.msra.mxu0 0
  %211 = vmatpush.bf16.msra.mxu0 0
  %212 = vmatpush.bf16.msra.mxu0 0
  %213 = vmatpush.bf16.msra.mxu0 %v200
  %214 = vmatpush.bf16.msra.mxu0 %v199
  %215 = vmatpush.bf16.msra.mxu0 %v198
  %216 = vmatpush.bf16.msra.mxu0 %v197
  %217 = vmatmul.bf16.gmra.mxu0 %v207
  %v218 = vpop.f32.mrf.mxu0
  %v219 = vadd.f32 %v179, %v218
  %v220 = vpop.f32.mrf.mxu0
  %v221 = vadd.f32 %v179, %v220
  %222 = vdwg.mxu0
  %v223 = vmax.f32 %v219, 0.0
  %v224 = vmax.f32 %v221, 0.0
  %v225 = vld [vmem:[%s8] sm:$0x1]
  %v227 = vperm.slane %v225, 0
  %v229 = vmul.f32 %v223, %v227
  %v230 = vmul.f32 %v224, %v227
  %vm231 = vcmask 261120
  %v232 = vsel %vm231, %v229, 0.0
  %233 = vadd.xlane.f32.xlu0 %v232
  %v234 = vpop.xlane.xlu0 %233
  %v235 = vsel %vm231, %v230, 0.0
  %236 = vadd.xlane.f32.xlu0 %v235
  %v237 = vpop.xlane.xlu0 %236
  %v238 = vld [vmem:[#allocation2] sm:$0x1]
  %v240 = vperm.slane %v238, 0
  %v242 = vadd.f32 %v234, %v240
  %v243 = vadd.f32 %v237, %v240
  %v244 = vld [vmem:[%s0] sm:$0xff]
  %v245 = vld [vmem:[%s0 + $0x8] sm:$0xff]
  %v246 = vsub.f32 %v244, %v242
  %v247 = vsub.f32 %v245, %v243
  %250 = vrot.lane.b32.xlu0 %v242, 1
  %v251 = vpop.permute.xlu0 %250
  %252 = vrot.lane.b32.xlu0 %v243, 1
  %v253 = vpop.permute.xlu0 %252
  %vm256 = vcmask 7168
  %v257 = vsel %vm256, %v246, %v251
  %v258 = vsel %vm256, %v247, %v253
  %vm259 = vcmask 15360
  %260 = vst.msk [vmem:[%s10] sm:$0xff] %vm259, %v257
  %261 = vst.msk [vmem:[%s10 + $0x8] sm:$0xff] %vm259, %v258
  // Predicated region
  $region42: #{tpu_custom_call.1} parent=0 // pred_check
    _
  $region43: #{tpu_custom_call.1} parent=0 // pred_check_branch
    %263 = sbr.rel (0) target = $region45
  $region44: #{tpu_custom_call.1} parent=0 // pred_region
    _
  $region45: #{tpu_custom_call.1} parent=0 // pred_fallthru
    _
  // Predicated region
  $region46: #{tpu_custom_call.1} parent=0 // pred_check
    _
  $region47: #{tpu_custom_call.1} parent=0 // pred_check_branch
    %265 = sbr.rel (0) target = $region49
  $region48: #{tpu_custom_call.1} parent=0 // pred_region
    _
  $region49: #{tpu_custom_call.1} parent=0 // pred_fallthru
    _

</llo_original>
